<compile_context>
chip_gen: v7x
topology: tpu7x:2x2x1
jax: 0.10.0
libtpu: 0.0.40
codegen_flags: <defaults>
</compile_context>

<pallas_src>
import functools
import math

import jax
import jax.numpy as jnp
from jax import lax
from jax.experimental import pallas as pl
from jax.experimental.pallas import tpu as pltpu

_LANES = 128
_MAX_TILE_ROWS = 2048      # 2048 * 128 * 4 B = 1 MiB f32 tile
_MIN_TILE_ROWS = 512
_HIST_BITS = 4
_NBINS = 1 << _HIST_BITS   # 16 cumulative-count thresholds per round
_KEY_BITS = 31             # losses >= 0  ->  keys are non-negative int32


def _bce_tile(p_ref, g_ref, tile_rows, total_rows):
    """f32 BCE (nn.BCELoss log clamp at -100) for one tile; OOB rows -> +0."""
    p = p_ref[...].astype(jnp.float32)
    g = g_ref[...].astype(jnp.float32)
    # Formulated with non-negative terms so the result is never -0.0 / negative.
    nlog_p = jnp.minimum(-jnp.log(p), 100.0)
    nlog_1mp = jnp.minimum(-jnp.log(1.0 - p), 100.0)
    loss = g * nlog_p + (1.0 - g) * nlog_1mp
    # Mask rows of the ragged last grid block (OOB reads -> garbage) to exactly 0.
    row0 = pl.program_id(0) * tile_rows
    rid = row0 + lax.broadcasted_iota(jnp.int32, loss.shape, 0)
    return jnp.where(rid < total_rows, loss, 0.0)


def _keys(loss_f32):
    """Monotone non-negative int32 key of a non-negative f32 (clamp kills -0.0)."""
    return jnp.maximum(pltpu.bitcast(loss_f32, jnp.int32), 0)


def _accum_hist(keys, thresholds, cnt_ref):
    """Per-lane cumulative counts  #{key >= t_j}  into a (1, NBINS, 128) block."""
    for j, t in enumerate(thresholds):
        cnt_ref[0, j, :] = jnp.sum((keys >= t).astype(jnp.int32), axis=0)


def _bce_hist_kernel(p_ref, g_ref, loss_ref, cnt_ref, *, tile_rows, total_rows,
                     thresholds):
    loss = _bce_tile(p_ref, g_ref, tile_rows, total_rows)
    loss_ref[...] = loss
    _accum_hist(_keys(loss), thresholds, cnt_ref)


def _hist_kernel(thr_ref, loss_ref, cnt_ref):
    keys = _keys(loss_ref[...])
    _accum_hist(keys, [thr_ref[j] for j in range(_NBINS)], cnt_ref)


def _select_sum_kernel(tkey_ref, loss_ref, sum_ref, cnt_ref):
    loss = loss_ref[...]
    mask = _keys(loss) > tkey_ref[0]
    lane_sum = jnp.sum(jnp.where(mask, loss, 0.0), axis=0)      # (128,)
    lane_cnt = jnp.sum(mask.astype(jnp.int32), axis=0)          # (128,)
    sub = lax.broadcasted_iota(jnp.int32, (8, _LANES), 0)
    sum_ref[0, :, :] = jnp.where(sub == 0, lane_sum[None, :], 0.0)
    cnt_ref[0, :, :] = jnp.where(sub == 0, lane_cnt[None, :], 0)


def _choose_tiling(rows):
    if rows <= _MIN_TILE_ROWS:
        return rows, 1                                   # single full-array block
    grid = max(2, pl.cdiv(rows, _MAX_TILE_ROWS))         # never 1 block (megacore)
    grid = max(grid, min(4, rows // _MIN_TILE_ROWS))     # prefer >=4 steps if tiles stay >=512 rows
    tile = ((pl.cdiv(rows, grid) + 15) // 16) * 16       # sublane-friendly (also bf16)
    return tile, pl.cdiv(rows, tile)


def topk_loss(preds, gt_masks, k_percent=10):
    """Reproduces TopKLoss.forward(preds, gt_masks)."""
    assert preds.shape == gt_masks.shape
    num_pixels = math.prod(preds.shape)
    k = int(num_pixels * k_percent / 100)   # same truncation as the reference
    assert k > 0, "TopKLoss needs enough pixels so that k >= 1"

    p = preds.reshape(-1)
    g = gt_masks.reshape(-1)

    # Lane-align only if needed.  Pad pixels get loss exactly +0.0, which can
    # never perturb the top-k threshold or the sum of values above it.
    pad = (-num_pixels) % _LANES
    if pad:
        p = jnp.pad(p, (0, pad))
        g = jnp.pad(g, (0, pad))
    rows = (num_pixels + pad) // _LANES
    p2 = p.reshape(rows, _LANES)
    g2 = g.reshape(rows, _LANES)

    tile_rows, grid = _choose_tiling(rows)
    rows_pad = tile_rows * grid

    cparams = pltpu.CompilerParams(
        dimension_semantics=("parallel",),
        vmem_limit_bytes=32 * 1024 * 1024,
    )

    # Static radix-narrowing schedule over the 31-bit non-negative key space.
    shifts = []
    s = _KEY_BITS
    while s > 0:
        s = max(s - _HIST_BITS, 0)
        shifts.append(s)                    # [27, 23, 19, 15, 11, 7, 3, 0]

    # ---- pass 1: BCE (native dtype in, f32 out) fused with round-1 histogram --
    r1_thresh = [j << shifts[0] for j in range(_NBINS)]
    bce_kernel = functools.partial(_bce_hist_kernel, tile_rows=tile_rows,
                                   total_rows=rows, thresholds=r1_thresh)
    loss_arr, cnt = pl.pallas_call(
        bce_kernel,
        out_shape=(jax.ShapeDtypeStruct((rows_pad, _LANES), jnp.float32),
                   jax.ShapeDtypeStruct((grid, _NBINS, _LANES), jnp.int32)),
        grid_spec=pltpu.PrefetchScalarGridSpec(
            num_scalar_prefetch=0,
            grid=(grid,),
            in_specs=[pl.BlockSpec((tile_rows, _LANES), lambda i: (i, 0)),
                      pl.BlockSpec((tile_rows, _LANES), lambda i: (i, 0))],
            out_specs=(pl.BlockSpec((tile_rows, _LANES), lambda i: (i, 0)),
                       pl.BlockSpec((1, _NBINS, _LANES), lambda i: (i, 0, 0))),
        ),
        compiler_params=cparams,
    )(p2, g2)

    def pick(counts_3d, lo, shift):
        counts = jnp.sum(counts_3d, axis=(0, 2))            # (NBINS,) int32
        j = jnp.sum((counts >= k).astype(jnp.int32)) - 1    # largest bin with >= k above
        return lo + (j << shift)

    lo = pick(cnt, jnp.int32(0), shifts[0])

    # ---- narrowing rounds over the materialized loss array ----
    hist_call = pl.pallas_call(
        _hist_kernel,
        out_shape=jax.ShapeDtypeStruct((grid, _NBINS, _LANES), jnp.int32),
        grid_spec=pltpu.PrefetchScalarGridSpec(
            num_scalar_prefetch=1,
            grid=(grid,),
            in_specs=[pl.BlockSpec((tile_rows, _LANES), lambda i, thr: (i, 0))],
            out_specs=pl.BlockSpec((1, _NBINS, _LANES), lambda i, thr: (i, 0, 0)),
        ),
        compiler_params=cparams,
    )
    for sh in shifts[1:]:
        thr = lo + (jnp.arange(_NBINS, dtype=jnp.int32) << sh)
        lo = pick(hist_call(thr, loss_arr), lo, sh)

    t_key = lo                                              # exact k-th largest key
    t_val = lax.bitcast_convert_type(t_key, jnp.float32)    # exact k-th largest BCE

    # ---- final pass: sum & count of losses strictly above the threshold ----
    sums, cnts = pl.pallas_call(
        _select_sum_kernel,
        out_shape=(jax.ShapeDtypeStruct((grid, 8, _LANES), jnp.float32),
                   jax.ShapeDtypeStruct((grid, 8, _LANES), jnp.int32)),
        grid_spec=pltpu.PrefetchScalarGridSpec(
            num_scalar_prefetch=1,
            grid=(grid,),
            in_specs=[pl.BlockSpec((tile_rows, _LANES), lambda i, t: (i, 0))],
            out_specs=(pl.BlockSpec((1, 8, _LANES), lambda i, t: (i, 0, 0)),
                       pl.BlockSpec((1, 8, _LANES), lambda i, t: (i, 0, 0))),
        ),
        compiler_params=cparams,
    )(t_key.reshape(1), loss_arr)

    s_gt = jnp.sum(sums)
    c_gt = jnp.sum(cnts)
    # Tie-invariant exact top-k mean: all values > T plus (k - #{>T}) copies of T.
    return (s_gt + (k - c_gt).astype(jnp.float32) * t_val) / k


if __name__ == "__main__":
    key = jax.random.PRNGKey(0)
    kp, kg = jax.random.split(key)

    # Small shapes consistent with a segmentation mask head: NCHW [2, 1, 16, 16].
    B, C, H, W = 2, 1, 16, 16
    preds = jax.nn.sigmoid(jax.random.normal(kp, (B, C, H, W), jnp.float32))
    gt_masks = (jax.random.uniform(kg, (B, C, H, W)) > 0.8).astype(jnp.float32)

    loss = jax.jit(topk_loss)(preds, gt_masks)
    jax.block_until_ready(loss)

    # Pure-JAX reference with identical BCE clamp + top-k-mean semantics.
    p = preds.reshape(-1).astype(jnp.float32)
    g = gt_masks.reshape(-1).astype(jnp.float32)
    bce_ref = -(g * jnp.maximum(jnp.log(p), -100.0)
                + (1.0 - g) * jnp.maximum(jnp.log(1.0 - p), -100.0))
    k_ref = int(p.size * 10 / 100)
    ref = jnp.mean(jax.lax.top_k(bce_ref, k_ref)[0])

    assert loss.shape == () and bool(jnp.isfinite(loss))
    assert bool(jnp.allclose(loss, ref, rtol=1e-4, atol=1e-6)), (loss, ref)
    print("KERNEL_OK")
</pallas_src>

<mosaic_0001>
module attributes {stable_mosaic.version = 11 : i64} {
  func.func @_bce_hist_kernel(%arg0: i32, %arg1: memref<4x128xf32, #tpu.memory_space<vmem>>, %arg2: memref<4x128xf32, #tpu.memory_space<vmem>>, %arg3: memref<4x128xf32, #tpu.memory_space<vmem>>, %arg4: memref<1x16x128xi32, #tpu.memory_space<vmem>>) attributes {dimension_semantics = [#tpu.dimension_semantics<parallel>], iteration_bounds = array<i64: 1>, scalar_prefetch = 0 : i64, scratch_operands = 0 : i64, tpu.core_type = #tpu.core_type<tc>, window_params = [{transform_indices = @transform_0, window_bounds = array<i64: 4, 128>}, {transform_indices = @transform_1, window_bounds = array<i64: 4, 128>}, {transform_indices = @transform_2, window_bounds = array<i64: 4, 128>}, {transform_indices = @transform_3, window_bounds = array<i64: 1, 16, 128>}]} {
    %c0 = arith.constant 0 : index
    %c0_0 = arith.constant 0 : index
    %0 = vector.load %arg1[%c0, %c0_0] : memref<4x128xf32, #tpu.memory_space<vmem>>, vector<4x128xf32>
    %c0_1 = arith.constant 0 : index
    %c0_2 = arith.constant 0 : index
    %1 = vector.load %arg2[%c0_1, %c0_2] : memref<4x128xf32, #tpu.memory_space<vmem>>, vector<4x128xf32>
    %2 = math.log %0 : vector<4x128xf32>
    %cst = arith.constant 0.000000e+00 : f32
    %3 = vector.broadcast %cst : f32 to vector<4x128xf32>
    %4 = arith.subf %3, %2 : vector<4x128xf32>
    %cst_3 = arith.constant 1.000000e+02 : f32
    %5 = vector.broadcast %cst_3 : f32 to vector<4x128xf32>
    %6 = arith.minimumf %4, %5 : vector<4x128xf32>
    %cst_4 = arith.constant 1.000000e+00 : f32
    %7 = vector.broadcast %cst_4 : f32 to vector<4x128xf32>
    %8 = arith.subf %7, %0 : vector<4x128xf32>
    %9 = math.log %8 : vector<4x128xf32>
    %cst_5 = arith.constant 0.000000e+00 : f32
    %10 = vector.broadcast %cst_5 : f32 to vector<4x128xf32>
    %11 = arith.subf %10, %9 : vector<4x128xf32>
    %cst_6 = arith.constant 1.000000e+02 : f32
    %12 = vector.broadcast %cst_6 : f32 to vector<4x128xf32>
    %13 = arith.minimumf %11, %12 : vector<4x128xf32>
    %14 = arith.mulf %1, %6 : vector<4x128xf32>
    %cst_7 = arith.constant 1.000000e+00 : f32
    %15 = vector.broadcast %cst_7 : f32 to vector<4x128xf32>
    %16 = arith.subf %15, %1 : vector<4x128xf32>
    %17 = arith.mulf %16, %13 : vector<4x128xf32>
    %18 = arith.addf %14, %17 : vector<4x128xf32>
    %c4_i32 = arith.constant 4 : i32
    %19 = arith.muli %arg0, %c4_i32 : i32
    %20 = tpu.iota {dimensions = array<i32: 0>} : vector<4x128xi32>
    %21 = vector.broadcast %19 : i32 to vector<4x128xi32>
    %22 = arith.addi %21, %20 : vector<4x128xi32>
    %c4_i32_8 = arith.constant 4 : i32
    %23 = vector.broadcast %c4_i32_8 : i32 to vector<4x128xi32>
    %24 = arith.cmpi slt, %22, %23 : vector<4x128xi32>
    %cst_9 = arith.constant 0.000000e+00 : f32
    %25 = vector.broadcast %cst_9 : f32 to vector<4x128xf32>
    %26 = arith.select %24, %18, %25 : vector<4x128xi1>, vector<4x128xf32>
    %c0_10 = arith.constant 0 : index
    %c0_11 = arith.constant 0 : index
    %27 = vector.load %arg3[%c0_10, %c0_11] : memref<4x128xf32, #tpu.memory_space<vmem>>, vector<4x128xf32>
    tpu.vector_store %arg3[%c0_10, %c0_11], %26 {strides = array<i32>} : memref<4x128xf32, #tpu.memory_space<vmem>>, vector<4x128xf32>,
    %28 = tpu.bitcast %26 : vector<4x128xf32> -> vector<4x128xi32>
    %c0_i32 = arith.constant 0 : i32
    %29 = vector.broadcast %c0_i32 : i32 to vector<4x128xi32>
    %30 = arith.maxsi %28, %29 : vector<4x128xi32>
    %c0_i32_12 = arith.constant 0 : i32
    %31 = vector.broadcast %c0_i32_12 : i32 to vector<4x128xi32>
    %32 = arith.cmpi sge, %30, %31 : vector<4x128xi32>
    %33 = arith.extui %32 : vector<4x128xi1> to vector<4x128xi32>
    %cst_13 = arith.constant dense<0> : vector<128xi32>
    %34 = vector.multi_reduction <add>, %33, %cst_13 [0] : vector<4x128xi32> to vector<128xi32>
    %c0_14 = arith.constant 0 : index
    %c0_15 = arith.constant 0 : index
    %c0_16 = arith.constant 0 : index
    %35 = vector.load %arg4[%c0_14, %c0_15, %c0_16] : memref<1x16x128xi32, #tpu.memory_space<vmem>>, vector<1x1x128xi32>
    %36 = vector.shape_cast %35 : vector<1x1x128xi32> to vector<128xi32>
    %37 = vector.shape_cast %34 : vector<128xi32> to vector<1x1x128xi32>
    tpu.vector_store %arg4[%c0_14, %c0_15, %c0_16], %37 {strides = array<i32>} : memref<1x16x128xi32, #tpu.memory_space<vmem>>, vector<1x1x128xi32>,
    %c134217728_i32 = arith.constant 134217728 : i32
    %38 = vector.broadcast %c134217728_i32 : i32 to vector<4x128xi32>
    %39 = arith.cmpi sge, %30, %38 : vector<4x128xi32>
    %40 = arith.extui %39 : vector<4x128xi1> to vector<4x128xi32>
    %cst_17 = arith.constant dense<0> : vector<128xi32>
    %41 = vector.multi_reduction <add>, %40, %cst_17 [0] : vector<4x128xi32> to vector<128xi32>
    %c0_18 = arith.constant 0 : index
    %c1 = arith.constant 1 : index
    %c0_19 = arith.constant 0 : index
    %42 = vector.load %arg4[%c0_18, %c1, %c0_19] : memref<1x16x128xi32, #tpu.memory_space<vmem>>, vector<1x1x128xi32>
    %43 = vector.shape_cast %42 : vector<1x1x128xi32> to vector<128xi32>
    %44 = vector.shape_cast %41 : vector<128xi32> to vector<1x1x128xi32>
    tpu.vector_store %arg4[%c0_18, %c1, %c0_19], %44 {strides = array<i32>} : memref<1x16x128xi32, #tpu.memory_space<vmem>>, vector<1x1x128xi32>,
    %c268435456_i32 = arith.constant 268435456 : i32
    %45 = vector.broadcast %c268435456_i32 : i32 to vector<4x128xi32>
    %46 = arith.cmpi sge, %30, %45 : vector<4x128xi32>
    %47 = arith.extui %46 : vector<4x128xi1> to vector<4x128xi32>
    %cst_20 = arith.constant dense<0> : vector<128xi32>
    %48 = vector.multi_reduction <add>, %47, %cst_20 [0] : vector<4x128xi32> to vector<128xi32>
    %c0_21 = arith.constant 0 : index
    %c2 = arith.constant 2 : index
    %c0_22 = arith.constant 0 : index
    %49 = vector.load %arg4[%c0_21, %c2, %c0_22] : memref<1x16x128xi32, #tpu.memory_space<vmem>>, vector<1x1x128xi32>
    %50 = vector.shape_cast %49 : vector<1x1x128xi32> to vector<128xi32>
    %51 = vector.shape_cast %48 : vector<128xi32> to vector<1x1x128xi32>
    tpu.vector_store %arg4[%c0_21, %c2, %c0_22], %51 {strides = array<i32>} : memref<1x16x128xi32, #tpu.memory_space<vmem>>, vector<1x1x128xi32>,
    %c402653184_i32 = arith.constant 402653184 : i32
    %52 = vector.broadcast %c402653184_i32 : i32 to vector<4x128xi32>
    %53 = arith.cmpi sge, %30, %52 : vector<4x128xi32>
    %54 = arith.extui %53 : vector<4x128xi1> to vector<4x128xi32>
    %cst_23 = arith.constant dense<0> : vector<128xi32>
    %55 = vector.multi_reduction <add>, %54, %cst_23 [0] : vector<4x128xi32> to vector<128xi32>
    %c0_24 = arith.constant 0 : index
    %c3 = arith.constant 3 : index
    %c0_25 = arith.constant 0 : index
    %56 = vector.load %arg4[%c0_24, %c3, %c0_25] : memref<1x16x128xi32, #tpu.memory_space<vmem>>, vector<1x1x128xi32>
    %57 = vector.shape_cast %56 : vector<1x1x128xi32> to vector<128xi32>
    %58 = vector.shape_cast %55 : vector<128xi32> to vector<1x1x128xi32>
    tpu.vector_store %arg4[%c0_24, %c3, %c0_25], %58 {strides = array<i32>} : memref<1x16x128xi32, #tpu.memory_space<vmem>>, vector<1x1x128xi32>,
    %c536870912_i32 = arith.constant 536870912 : i32
    %59 = vector.broadcast %c536870912_i32 : i32 to vector<4x128xi32>
    %60 = arith.cmpi sge, %30, %59 : vector<4x128xi32>
    %61 = arith.extui %60 : vector<4x128xi1> to vector<4x128xi32>
    %cst_26 = arith.constant dense<0> : vector<128xi32>
    %62 = vector.multi_reduction <add>, %61, %cst_26 [0] : vector<4x128xi32> to vector<128xi32>
    %c0_27 = arith.constant 0 : index
    %c4 = arith.constant 4 : index
    %c0_28 = arith.constant 0 : index
    %63 = vector.load %arg4[%c0_27, %c4, %c0_28] : memref<1x16x128xi32, #tpu.memory_space<vmem>>, vector<1x1x128xi32>
    %64 = vector.shape_cast %63 : vector<1x1x128xi32> to vector<128xi32>
    %65 = vector.shape_cast %62 : vector<128xi32> to vector<1x1x128xi32>
    tpu.vector_store %arg4[%c0_27, %c4, %c0_28], %65 {strides = array<i32>} : memref<1x16x128xi32, #tpu.memory_space<vmem>>, vector<1x1x128xi32>,
    %c671088640_i32 = arith.constant 671088640 : i32
    %66 = vector.broadcast %c671088640_i32 : i32 to vector<4x128xi32>
    %67 = arith.cmpi sge, %30, %66 : vector<4x128xi32>
    %68 = arith.extui %67 : vector<4x128xi1> to vector<4x128xi32>
    %cst_29 = arith.constant dense<0> : vector<128xi32>
    %69 = vector.multi_reduction <add>, %68, %cst_29 [0] : vector<4x128xi32> to vector<128xi32>
    %c0_30 = arith.constant 0 : index
    %c5 = arith.constant 5 : index
    %c0_31 = arith.constant 0 : index
    %70 = vector.load %arg4[%c0_30, %c5, %c0_31] : memref<1x16x128xi32, #tpu.memory_space<vmem>>, vector<1x1x128xi32>
    %71 = vector.shape_cast %70 : vector<1x1x128xi32> to vector<128xi32>
    %72 = vector.shape_cast %69 : vector<128xi32> to vector<1x1x128xi32>
    tpu.vector_store %arg4[%c0_30, %c5, %c0_31], %72 {strides = array<i32>} : memref<1x16x128xi32, #tpu.memory_space<vmem>>, vector<1x1x128xi32>,
    %c805306368_i32 = arith.constant 805306368 : i32
    %73 = vector.broadcast %c805306368_i32 : i32 to vector<4x128xi32>
    %74 = arith.cmpi sge, %30, %73 : vector<4x128xi32>
    %75 = arith.extui %74 : vector<4x128xi1> to vector<4x128xi32>
    %cst_32 = arith.constant dense<0> : vector<128xi32>
    %76 = vector.multi_reduction <add>, %75, %cst_32 [0] : vector<4x128xi32> to vector<128xi32>
    %c0_33 = arith.constant 0 : index
    %c6 = arith.constant 6 : index
    %c0_34 = arith.constant 0 : index
    %77 = vector.load %arg4[%c0_33, %c6, %c0_34] : memref<1x16x128xi32, #tpu.memory_space<vmem>>, vector<1x1x128xi32>
    %78 = vector.shape_cast %77 : vector<1x1x128xi32> to vector<128xi32>
    %79 = vector.shape_cast %76 : vector<128xi32> to vector<1x1x128xi32>
    tpu.vector_store %arg4[%c0_33, %c6, %c0_34], %79 {strides = array<i32>} : memref<1x16x128xi32, #tpu.memory_space<vmem>>, vector<1x1x128xi32>,
    %c939524096_i32 = arith.constant 939524096 : i32
    %80 = vector.broadcast %c939524096_i32 : i32 to vector<4x128xi32>
    %81 = arith.cmpi sge, %30, %80 : vector<4x128xi32>
    %82 = arith.extui %81 : vector<4x128xi1> to vector<4x128xi32>
    %cst_35 = arith.constant dense<0> : vector<128xi32>
    %83 = vector.multi_reduction <add>, %82, %cst_35 [0] : vector<4x128xi32> to vector<128xi32>
    %c0_36 = arith.constant 0 : index
    %c7 = arith.constant 7 : index
    %c0_37 = arith.constant 0 : index
    %84 = vector.load %arg4[%c0_36, %c7, %c0_37] : memref<1x16x128xi32, #tpu.memory_space<vmem>>, vector<1x1x128xi32>
    %85 = vector.shape_cast %84 : vector<1x1x128xi32> to vector<128xi32>
    %86 = vector.shape_cast %83 : vector<128xi32> to vector<1x1x128xi32>
    tpu.vector_store %arg4[%c0_36, %c7, %c0_37], %86 {strides = array<i32>} : memref<1x16x128xi32, #tpu.memory_space<vmem>>, vector<1x1x128xi32>,
    %c1073741824_i32 = arith.constant 1073741824 : i32
    %87 = vector.broadcast %c1073741824_i32 : i32 to vector<4x128xi32>
    %88 = arith.cmpi sge, %30, %87 : vector<4x128xi32>
    %89 = arith.extui %88 : vector<4x128xi1> to vector<4x128xi32>
    %cst_38 = arith.constant dense<0> : vector<128xi32>
    %90 = vector.multi_reduction <add>, %89, %cst_38 [0] : vector<4x128xi32> to vector<128xi32>
    %c0_39 = arith.constant 0 : index
    %c8 = arith.constant 8 : index
    %c0_40 = arith.constant 0 : index
    %91 = vector.load %arg4[%c0_39, %c8, %c0_40] : memref<1x16x128xi32, #tpu.memory_space<vmem>>, vector<1x1x128xi32>
    %92 = vector.shape_cast %91 : vector<1x1x128xi32> to vector<128xi32>
    %93 = vector.shape_cast %90 : vector<128xi32> to vector<1x1x128xi32>
    tpu.vector_store %arg4[%c0_39, %c8, %c0_40], %93 {strides = array<i32>} : memref<1x16x128xi32, #tpu.memory_space<vmem>>, vector<1x1x128xi32>,
    %c1207959552_i32 = arith.constant 1207959552 : i32
    %94 = vector.broadcast %c1207959552_i32 : i32 to vector<4x128xi32>
    %95 = arith.cmpi sge, %30, %94 : vector<4x128xi32>
    %96 = arith.extui %95 : vector<4x128xi1> to vector<4x128xi32>
    %cst_41 = arith.constant dense<0> : vector<128xi32>
    %97 = vector.multi_reduction <add>, %96, %cst_41 [0] : vector<4x128xi32> to vector<128xi32>
    %c0_42 = arith.constant 0 : index
    %c9 = arith.constant 9 : index
    %c0_43 = arith.constant 0 : index
    %98 = vector.load %arg4[%c0_42, %c9, %c0_43] : memref<1x16x128xi32, #tpu.memory_space<vmem>>, vector<1x1x128xi32>
    %99 = vector.shape_cast %98 : vector<1x1x128xi32> to vector<128xi32>
    %100 = vector.shape_cast %97 : vector<128xi32> to vector<1x1x128xi32>
    tpu.vector_store %arg4[%c0_42, %c9, %c0_43], %100 {strides = array<i32>} : memref<1x16x128xi32, #tpu.memory_space<vmem>>, vector<1x1x128xi32>,
    %c1342177280_i32 = arith.constant 1342177280 : i32
    %101 = vector.broadcast %c1342177280_i32 : i32 to vector<4x128xi32>
    %102 = arith.cmpi sge, %30, %101 : vector<4x128xi32>
    %103 = arith.extui %102 : vector<4x128xi1> to vector<4x128xi32>
    %cst_44 = arith.constant dense<0> : vector<128xi32>
    %104 = vector.multi_reduction <add>, %103, %cst_44 [0] : vector<4x128xi32> to vector<128xi32>
    %c0_45 = arith.constant 0 : index
    %c10 = arith.constant 10 : index
    %c0_46 = arith.constant 0 : index
    %105 = vector.load %arg4[%c0_45, %c10, %c0_46] : memref<1x16x128xi32, #tpu.memory_space<vmem>>, vector<1x1x128xi32>
    %106 = vector.shape_cast %105 : vector<1x1x128xi32> to vector<128xi32>
    %107 = vector.shape_cast %104 : vector<128xi32> to vector<1x1x128xi32>
    tpu.vector_store %arg4[%c0_45, %c10, %c0_46], %107 {strides = array<i32>} : memref<1x16x128xi32, #tpu.memory_space<vmem>>, vector<1x1x128xi32>,
    %c1476395008_i32 = arith.constant 1476395008 : i32
    %108 = vector.broadcast %c1476395008_i32 : i32 to vector<4x128xi32>
    %109 = arith.cmpi sge, %30, %108 : vector<4x128xi32>
    %110 = arith.extui %109 : vector<4x128xi1> to vector<4x128xi32>
    %cst_47 = arith.constant dense<0> : vector<128xi32>
    %111 = vector.multi_reduction <add>, %110, %cst_47 [0] : vector<4x128xi32> to vector<128xi32>
    %c0_48 = arith.constant 0 : index
    %c11 = arith.constant 11 : index
    %c0_49 = arith.constant 0 : index
    %112 = vector.load %arg4[%c0_48, %c11, %c0_49] : memref<1x16x128xi32, #tpu.memory_space<vmem>>, vector<1x1x128xi32>
    %113 = vector.shape_cast %112 : vector<1x1x128xi32> to vector<128xi32>
    %114 = vector.shape_cast %111 : vector<128xi32> to vector<1x1x128xi32>
    tpu.vector_store %arg4[%c0_48, %c11, %c0_49], %114 {strides = array<i32>} : memref<1x16x128xi32, #tpu.memory_space<vmem>>, vector<1x1x128xi32>,
    %c1610612736_i32 = arith.constant 1610612736 : i32
    %115 = vector.broadcast %c1610612736_i32 : i32 to vector<4x128xi32>
    %116 = arith.cmpi sge, %30, %115 : vector<4x128xi32>
    %117 = arith.extui %116 : vector<4x128xi1> to vector<4x128xi32>
    %cst_50 = arith.constant dense<0> : vector<128xi32>
    %118 = vector.multi_reduction <add>, %117, %cst_50 [0] : vector<4x128xi32> to vector<128xi32>
    %c0_51 = arith.constant 0 : index
    %c12 = arith.constant 12 : index
    %c0_52 = arith.constant 0 : index
    %119 = vector.load %arg4[%c0_51, %c12, %c0_52] : memref<1x16x128xi32, #tpu.memory_space<vmem>>, vector<1x1x128xi32>
    %120 = vector.shape_cast %119 : vector<1x1x128xi32> to vector<128xi32>
    %121 = vector.shape_cast %118 : vector<128xi32> to vector<1x1x128xi32>
    tpu.vector_store %arg4[%c0_51, %c12, %c0_52], %121 {strides = array<i32>} : memref<1x16x128xi32, #tpu.memory_space<vmem>>, vector<1x1x128xi32>,
    %c1744830464_i32 = arith.constant 1744830464 : i32
    %122 = vector.broadcast %c1744830464_i32 : i32 to vector<4x128xi32>
    %123 = arith.cmpi sge, %30, %122 : vector<4x128xi32>
    %124 = arith.extui %123 : vector<4x128xi1> to vector<4x128xi32>
    %cst_53 = arith.constant dense<0> : vector<128xi32>
    %125 = vector.multi_reduction <add>, %124, %cst_53 [0] : vector<4x128xi32> to vector<128xi32>
    %c0_54 = arith.constant 0 : index
    %c13 = arith.constant 13 : index
    %c0_55 = arith.constant 0 : index
    %126 = vector.load %arg4[%c0_54, %c13, %c0_55] : memref<1x16x128xi32, #tpu.memory_space<vmem>>, vector<1x1x128xi32>
    %127 = vector.shape_cast %126 : vector<1x1x128xi32> to vector<128xi32>
    %128 = vector.shape_cast %125 : vector<128xi32> to vector<1x1x128xi32>
    tpu.vector_store %arg4[%c0_54, %c13, %c0_55], %128 {strides = array<i32>} : memref<1x16x128xi32, #tpu.memory_space<vmem>>, vector<1x1x128xi32>,
    %c1879048192_i32 = arith.constant 1879048192 : i32
    %129 = vector.broadcast %c1879048192_i32 : i32 to vector<4x128xi32>
    %130 = arith.cmpi sge, %30, %129 : vector<4x128xi32>
    %131 = arith.extui %130 : vector<4x128xi1> to vector<4x128xi32>
    %cst_56 = arith.constant dense<0> : vector<128xi32>
    %132 = vector.multi_reduction <add>, %131, %cst_56 [0] : vector<4x128xi32> to vector<128xi32>
    %c0_57 = arith.constant 0 : index
    %c14 = arith.constant 14 : index
    %c0_58 = arith.constant 0 : index
    %133 = vector.load %arg4[%c0_57, %c14, %c0_58] : memref<1x16x128xi32, #tpu.memory_space<vmem>>, vector<1x1x128xi32>
    %134 = vector.shape_cast %133 : vector<1x1x128xi32> to vector<128xi32>
    %135 = vector.shape_cast %132 : vector<128xi32> to vector<1x1x128xi32>
    tpu.vector_store %arg4[%c0_57, %c14, %c0_58], %135 {strides = array<i32>} : memref<1x16x128xi32, #tpu.memory_space<vmem>>, vector<1x1x128xi32>,
    %c2013265920_i32 = arith.constant 2013265920 : i32
    %136 = vector.broadcast %c2013265920_i32 : i32 to vector<4x128xi32>
    %137 = arith.cmpi sge, %30, %136 : vector<4x128xi32>
    %138 = arith.extui %137 : vector<4x128xi1> to vector<4x128xi32>
    %cst_59 = arith.constant dense<0> : vector<128xi32>
    %139 = vector.multi_reduction <add>, %138, %cst_59 [0] : vector<4x128xi32> to vector<128xi32>
    %c0_60 = arith.constant 0 : index
    %c15 = arith.constant 15 : index
    %c0_61 = arith.constant 0 : index
    %140 = vector.load %arg4[%c0_60, %c15, %c0_61] : memref<1x16x128xi32, #tpu.memory_space<vmem>>, vector<1x1x128xi32>
    %141 = vector.shape_cast %140 : vector<1x1x128xi32> to vector<128xi32>
    %142 = vector.shape_cast %139 : vector<128xi32> to vector<1x1x128xi32>
    tpu.vector_store %arg4[%c0_60, %c15, %c0_61], %142 {strides = array<i32>} : memref<1x16x128xi32, #tpu.memory_space<vmem>>, vector<1x1x128xi32>,
    return
  }
  func.func @transform_0(%arg0: i32) -> (i32, i32) {
    %c0_i32 = arith.constant 0 : i32
    %c0_i32_0 = arith.constant 0 : i32
    return %arg0, %c0_i32 : i32, i32
  }
  func.func @transform_1(%arg0: i32) -> (i32, i32) {
    %c0_i32 = arith.constant 0 : i32
    %c0_i32_0 = arith.constant 0 : i32
    return %arg0, %c0_i32 : i32, i32
  }
  func.func @transform_2(%arg0: i32) -> (i32, i32) {
    %c0_i32 = arith.constant 0 : i32
    %c0_i32_0 = arith.constant 0 : i32
    return %arg0, %c0_i32 : i32, i32
  }
  func.func @transform_3(%arg0: i32) -> (i32, i32, i32) {
    %c0_i32 = arith.constant 0 : i32
    %c0_i32_0 = arith.constant 0 : i32
    %c0_i32_1 = arith.constant 0 : i32
    return %arg0, %c0_i32, %c0_i32_0 : i32, i32, i32
  }
}

module attributes {stable_mosaic.version = 11 : i64} {
  func.func @_hist_kernel(%arg0: i32, %arg1: memref<16xi32, #tpu.memory_space<smem>>, %arg2: memref<4x128xf32, #tpu.memory_space<vmem>>, %arg3: memref<1x16x128xi32, #tpu.memory_space<vmem>>) attributes {dimension_semantics = [#tpu.dimension_semantics<parallel>], iteration_bounds = array<i64: 1>, scalar_prefetch = 1 : i64, scratch_operands = 0 : i64, tpu.core_type = #tpu.core_type<tc>, window_params = [{transform_indices = @transform_0, window_bounds = array<i64: 4, 128>}, {transform_indices = @transform_1, window_bounds = array<i64: 1, 16, 128>}]} {
    %c0 = arith.constant 0 : index
    %c0_0 = arith.constant 0 : index
    %0 = vector.load %arg2[%c0, %c0_0] : memref<4x128xf32, #tpu.memory_space<vmem>>, vector<4x128xf32>
    %1 = tpu.bitcast %0 : vector<4x128xf32> -> vector<4x128xi32>
    %c0_i32 = arith.constant 0 : i32
    %2 = vector.broadcast %c0_i32 : i32 to vector<4x128xi32>
    %3 = arith.maxsi %1, %2 : vector<4x128xi32>
    %c0_1 = arith.constant 0 : index
    %4 = memref.load %arg1[%c0_1] : memref<16xi32, #tpu.memory_space<smem>>
    %c1 = arith.constant 1 : index
    %5 = memref.load %arg1[%c1] : memref<16xi32, #tpu.memory_space<smem>>
    %c2 = arith.constant 2 : index
    %6 = memref.load %arg1[%c2] : memref<16xi32, #tpu.memory_space<smem>>
    %c3 = arith.constant 3 : index
    %7 = memref.load %arg1[%c3] : memref<16xi32, #tpu.memory_space<smem>>
    %c4 = arith.constant 4 : index
    %8 = memref.load %arg1[%c4] : memref<16xi32, #tpu.memory_space<smem>>
    %c5 = arith.constant 5 : index
    %9 = memref.load %arg1[%c5] : memref<16xi32, #tpu.memory_space<smem>>
    %c6 = arith.constant 6 : index
    %10 = memref.load %arg1[%c6] : memref<16xi32, #tpu.memory_space<smem>>
    %c7 = arith.constant 7 : index
    %11 = memref.load %arg1[%c7] : memref<16xi32, #tpu.memory_space<smem>>
    %c8 = arith.constant 8 : index
    %12 = memref.load %arg1[%c8] : memref<16xi32, #tpu.memory_space<smem>>
    %c9 = arith.constant 9 : index
    %13 = memref.load %arg1[%c9] : memref<16xi32, #tpu.memory_space<smem>>
    %c10 = arith.constant 10 : index
    %14 = memref.load %arg1[%c10] : memref<16xi32, #tpu.memory_space<smem>>
    %c11 = arith.constant 11 : index
    %15 = memref.load %arg1[%c11] : memref<16xi32, #tpu.memory_space<smem>>
    %c12 = arith.constant 12 : index
    %16 = memref.load %arg1[%c12] : memref<16xi32, #tpu.memory_space<smem>>
    %c13 = arith.constant 13 : index
    %17 = memref.load %arg1[%c13] : memref<16xi32, #tpu.memory_space<smem>>
    %c14 = arith.constant 14 : index
    %18 = memref.load %arg1[%c14] : memref<16xi32, #tpu.memory_space<smem>>
    %c15 = arith.constant 15 : index
    %19 = memref.load %arg1[%c15] : memref<16xi32, #tpu.memory_space<smem>>
    %20 = vector.broadcast %4 : i32 to vector<4x128xi32>
    %21 = arith.cmpi sge, %3, %20 : vector<4x128xi32>
    %22 = arith.extui %21 : vector<4x128xi1> to vector<4x128xi32>
    %cst = arith.constant dense<0> : vector<128xi32>
    %23 = vector.multi_reduction <add>, %22, %cst [0] : vector<4x128xi32> to vector<128xi32>
    %c0_2 = arith.constant 0 : index
    %c0_3 = arith.constant 0 : index
    %c0_4 = arith.constant 0 : index
    %24 = vector.load %arg3[%c0_2, %c0_3, %c0_4] : memref<1x16x128xi32, #tpu.memory_space<vmem>>, vector<1x1x128xi32>
    %25 = vector.shape_cast %24 : vector<1x1x128xi32> to vector<128xi32>
    %26 = vector.shape_cast %23 : vector<128xi32> to vector<1x1x128xi32>
    tpu.vector_store %arg3[%c0_2, %c0_3, %c0_4], %26 {strides = array<i32>} : memref<1x16x128xi32, #tpu.memory_space<vmem>>, vector<1x1x128xi32>,
    %27 = vector.broadcast %5 : i32 to vector<4x128xi32>
    %28 = arith.cmpi sge, %3, %27 : vector<4x128xi32>
    %29 = arith.extui %28 : vector<4x128xi1> to vector<4x128xi32>
    %cst_5 = arith.constant dense<0> : vector<128xi32>
    %30 = vector.multi_reduction <add>, %29, %cst_5 [0] : vector<4x128xi32> to vector<128xi32>
    %c0_6 = arith.constant 0 : index
    %c1_7 = arith.constant 1 : index
    %c0_8 = arith.constant 0 : index
    %31 = vector.load %arg3[%c0_6, %c1_7, %c0_8] : memref<1x16x128xi32, #tpu.memory_space<vmem>>, vector<1x1x128xi32>
    %32 = vector.shape_cast %31 : vector<1x1x128xi32> to vector<128xi32>
    %33 = vector.shape_cast %30 : vector<128xi32> to vector<1x1x128xi32>
    tpu.vector_store %arg3[%c0_6, %c1_7, %c0_8], %33 {strides = array<i32>} : memref<1x16x128xi32, #tpu.memory_space<vmem>>, vector<1x1x128xi32>,
    %34 = vector.broadcast %6 : i32 to vector<4x128xi32>
    %35 = arith.cmpi sge, %3, %34 : vector<4x128xi32>
    %36 = arith.extui %35 : vector<4x128xi1> to vector<4x128xi32>
    %cst_9 = arith.constant dense<0> : vector<128xi32>
    %37 = vector.multi_reduction <add>, %36, %cst_9 [0] : vector<4x128xi32> to vector<128xi32>
    %c0_10 = arith.constant 0 : index
    %c2_11 = arith.constant 2 : index
    %c0_12 = arith.constant 0 : index
    %38 = vector.load %arg3[%c0_10, %c2_11, %c0_12] : memref<1x16x128xi32, #tpu.memory_space<vmem>>, vector<1x1x128xi32>
    %39 = vector.shape_cast %38 : vector<1x1x128xi32> to vector<128xi32>
    %40 = vector.shape_cast %37 : vector<128xi32> to vector<1x1x128xi32>
    tpu.vector_store %arg3[%c0_10, %c2_11, %c0_12], %40 {strides = array<i32>} : memref<1x16x128xi32, #tpu.memory_space<vmem>>, vector<1x1x128xi32>,
    %41 = vector.broadcast %7 : i32 to vector<4x128xi32>
    %42 = arith.cmpi sge, %3, %41 : vector<4x128xi32>
    %43 = arith.extui %42 : vector<4x128xi1> to vector<4x128xi32>
    %cst_13 = arith.constant dense<0> : vector<128xi32>
    %44 = vector.multi_reduction <add>, %43, %cst_13 [0] : vector<4x128xi32> to vector<128xi32>
    %c0_14 = arith.constant 0 : index
    %c3_15 = arith.constant 3 : index
    %c0_16 = arith.constant 0 : index
    %45 = vector.load %arg3[%c0_14, %c3_15, %c0_16] : memref<1x16x128xi32, #tpu.memory_space<vmem>>, vector<1x1x128xi32>
    %46 = vector.shape_cast %45 : vector<1x1x128xi32> to vector<128xi32>
    %47 = vector.shape_cast %44 : vector<128xi32> to vector<1x1x128xi32>
    tpu.vector_store %arg3[%c0_14, %c3_15, %c0_16], %47 {strides = array<i32>} : memref<1x16x128xi32, #tpu.memory_space<vmem>>, vector<1x1x128xi32>,
    %48 = vector.broadcast %8 : i32 to vector<4x128xi32>
    %49 = arith.cmpi sge, %3, %48 : vector<4x128xi32>
    %50 = arith.extui %49 : vector<4x128xi1> to vector<4x128xi32>
    %cst_17 = arith.constant dense<0> : vector<128xi32>
    %51 = vector.multi_reduction <add>, %50, %cst_17 [0] : vector<4x128xi32> to vector<128xi32>
    %c0_18 = arith.constant 0 : index
    %c4_19 = arith.constant 4 : index
    %c0_20 = arith.constant 0 : index
    %52 = vector.load %arg3[%c0_18, %c4_19, %c0_20] : memref<1x16x128xi32, #tpu.memory_space<vmem>>, vector<1x1x128xi32>
    %53 = vector.shape_cast %52 : vector<1x1x128xi32> to vector<128xi32>
    %54 = vector.shape_cast %51 : vector<128xi32> to vector<1x1x128xi32>
    tpu.vector_store %arg3[%c0_18, %c4_19, %c0_20], %54 {strides = array<i32>} : memref<1x16x128xi32, #tpu.memory_space<vmem>>, vector<1x1x128xi32>,
    %55 = vector.broadcast %9 : i32 to vector<4x128xi32>
    %56 = arith.cmpi sge, %3, %55 : vector<4x128xi32>
    %57 = arith.extui %56 : vector<4x128xi1> to vector<4x128xi32>
    %cst_21 = arith.constant dense<0> : vector<128xi32>
    %58 = vector.multi_reduction <add>, %57, %cst_21 [0] : vector<4x128xi32> to vector<128xi32>
    %c0_22 = arith.constant 0 : index
    %c5_23 = arith.constant 5 : index
    %c0_24 = arith.constant 0 : index
    %59 = vector.load %arg3[%c0_22, %c5_23, %c0_24] : memref<1x16x128xi32, #tpu.memory_space<vmem>>, vector<1x1x128xi32>
    %60 = vector.shape_cast %59 : vector<1x1x128xi32> to vector<128xi32>
    %61 = vector.shape_cast %58 : vector<128xi32> to vector<1x1x128xi32>
    tpu.vector_store %arg3[%c0_22, %c5_23, %c0_24], %61 {strides = array<i32>} : memref<1x16x128xi32, #tpu.memory_space<vmem>>, vector<1x1x128xi32>,
    %62 = vector.broadcast %10 : i32 to vector<4x128xi32>
    %63 = arith.cmpi sge, %3, %62 : vector<4x128xi32>
    %64 = arith.extui %63 : vector<4x128xi1> to vector<4x128xi32>
    %cst_25 = arith.constant dense<0> : vector<128xi32>
    %65 = vector.multi_reduction <add>, %64, %cst_25 [0] : vector<4x128xi32> to vector<128xi32>
    %c0_26 = arith.constant 0 : index
    %c6_27 = arith.constant 6 : index
    %c0_28 = arith.constant 0 : index
    %66 = vector.load %arg3[%c0_26, %c6_27, %c0_28] : memref<1x16x128xi32, #tpu.memory_space<vmem>>, vector<1x1x128xi32>
    %67 = vector.shape_cast %66 : vector<1x1x128xi32> to vector<128xi32>
    %68 = vector.shape_cast %65 : vector<128xi32> to vector<1x1x128xi32>
    tpu.vector_store %arg3[%c0_26, %c6_27, %c0_28], %68 {strides = array<i32>} : memref<1x16x128xi32, #tpu.memory_space<vmem>>, vector<1x1x128xi32>,
    %69 = vector.broadcast %11 : i32 to vector<4x128xi32>
    %70 = arith.cmpi sge, %3, %69 : vector<4x128xi32>
    %71 = arith.extui %70 : vector<4x128xi1> to vector<4x128xi32>
    %cst_29 = arith.constant dense<0> : vector<128xi32>
    %72 = vector.multi_reduction <add>, %71, %cst_29 [0] : vector<4x128xi32> to vector<128xi32>
    %c0_30 = arith.constant 0 : index
    %c7_31 = arith.constant 7 : index
    %c0_32 = arith.constant 0 : index
    %73 = vector.load %arg3[%c0_30, %c7_31, %c0_32] : memref<1x16x128xi32, #tpu.memory_space<vmem>>, vector<1x1x128xi32>
    %74 = vector.shape_cast %73 : vector<1x1x128xi32> to vector<128xi32>
    %75 = vector.shape_cast %72 : vector<128xi32> to vector<1x1x128xi32>
    tpu.vector_store %arg3[%c0_30, %c7_31, %c0_32], %75 {strides = array<i32>} : memref<1x16x128xi32, #tpu.memory_space<vmem>>, vector<1x1x128xi32>,
    %76 = vector.broadcast %12 : i32 to vector<4x128xi32>
    %77 = arith.cmpi sge, %3, %76 : vector<4x128xi32>
    %78 = arith.extui %77 : vector<4x128xi1> to vector<4x128xi32>
    %cst_33 = arith.constant dense<0> : vector<128xi32>
    %79 = vector.multi_reduction <add>, %78, %cst_33 [0] : vector<4x128xi32> to vector<128xi32>
    %c0_34 = arith.constant 0 : index
    %c8_35 = arith.constant 8 : index
    %c0_36 = arith.constant 0 : index
    %80 = vector.load %arg3[%c0_34, %c8_35, %c0_36] : memref<1x16x128xi32, #tpu.memory_space<vmem>>, vector<1x1x128xi32>
    %81 = vector.shape_cast %80 : vector<1x1x128xi32> to vector<128xi32>
    %82 = vector.shape_cast %79 : vector<128xi32> to vector<1x1x128xi32>
    tpu.vector_store %arg3[%c0_34, %c8_35, %c0_36], %82 {strides = array<i32>} : memref<1x16x128xi32, #tpu.memory_space<vmem>>, vector<1x1x128xi32>,
    %83 = vector.broadcast %13 : i32 to vector<4x128xi32>
    %84 = arith.cmpi sge, %3, %83 : vector<4x128xi32>
    %85 = arith.extui %84 : vector<4x128xi1> to vector<4x128xi32>
    %cst_37 = arith.constant dense<0> : vector<128xi32>
    %86 = vector.multi_reduction <add>, %85, %cst_37 [0] : vector<4x128xi32> to vector<128xi32>
    %c0_38 = arith.constant 0 : index
    %c9_39 = arith.constant 9 : index
    %c0_40 = arith.constant 0 : index
    %87 = vector.load %arg3[%c0_38, %c9_39, %c0_40] : memref<1x16x128xi32, #tpu.memory_space<vmem>>, vector<1x1x128xi32>
    %88 = vector.shape_cast %87 : vector<1x1x128xi32> to vector<128xi32>
    %89 = vector.shape_cast %86 : vector<128xi32> to vector<1x1x128xi32>
    tpu.vector_store %arg3[%c0_38, %c9_39, %c0_40], %89 {strides = array<i32>} : memref<1x16x128xi32, #tpu.memory_space<vmem>>, vector<1x1x128xi32>,
    %90 = vector.broadcast %14 : i32 to vector<4x128xi32>
    %91 = arith.cmpi sge, %3, %90 : vector<4x128xi32>
    %92 = arith.extui %91 : vector<4x128xi1> to vector<4x128xi32>
    %cst_41 = arith.constant dense<0> : vector<128xi32>
    %93 = vector.multi_reduction <add>, %92, %cst_41 [0] : vector<4x128xi32> to vector<128xi32>
    %c0_42 = arith.constant 0 : index
    %c10_43 = arith.constant 10 : index
    %c0_44 = arith.constant 0 : index
    %94 = vector.load %arg3[%c0_42, %c10_43, %c0_44] : memref<1x16x128xi32, #tpu.memory_space<vmem>>, vector<1x1x128xi32>
    %95 = vector.shape_cast %94 : vector<1x1x128xi32> to vector<128xi32>
    %96 = vector.shape_cast %93 : vector<128xi32> to vector<1x1x128xi32>
    tpu.vector_store %arg3[%c0_42, %c10_43, %c0_44], %96 {strides = array<i32>} : memref<1x16x128xi32, #tpu.memory_space<vmem>>, vector<1x1x128xi32>,
    %97 = vector.broadcast %15 : i32 to vector<4x128xi32>
    %98 = arith.cmpi sge, %3, %97 : vector<4x128xi32>
    %99 = arith.extui %98 : vector<4x128xi1> to vector<4x128xi32>
    %cst_45 = arith.constant dense<0> : vector<128xi32>
    %100 = vector.multi_reduction <add>, %99, %cst_45 [0] : vector<4x128xi32> to vector<128xi32>
    %c0_46 = arith.constant 0 : index
    %c11_47 = arith.constant 11 : index
    %c0_48 = arith.constant 0 : index
    %101 = vector.load %arg3[%c0_46, %c11_47, %c0_48] : memref<1x16x128xi32, #tpu.memory_space<vmem>>, vector<1x1x128xi32>
    %102 = vector.shape_cast %101 : vector<1x1x128xi32> to vector<128xi32>
    %103 = vector.shape_cast %100 : vector<128xi32> to vector<1x1x128xi32>
    tpu.vector_store %arg3[%c0_46, %c11_47, %c0_48], %103 {strides = array<i32>} : memref<1x16x128xi32, #tpu.memory_space<vmem>>, vector<1x1x128xi32>,
    %104 = vector.broadcast %16 : i32 to vector<4x128xi32>
    %105 = arith.cmpi sge, %3, %104 : vector<4x128xi32>
    %106 = arith.extui %105 : vector<4x128xi1> to vector<4x128xi32>
    %cst_49 = arith.constant dense<0> : vector<128xi32>
    %107 = vector.multi_reduction <add>, %106, %cst_49 [0] : vector<4x128xi32> to vector<128xi32>
    %c0_50 = arith.constant 0 : index
    %c12_51 = arith.constant 12 : index
    %c0_52 = arith.constant 0 : index
    %108 = vector.load %arg3[%c0_50, %c12_51, %c0_52] : memref<1x16x128xi32, #tpu.memory_space<vmem>>, vector<1x1x128xi32>
    %109 = vector.shape_cast %108 : vector<1x1x128xi32> to vector<128xi32>
    %110 = vector.shape_cast %107 : vector<128xi32> to vector<1x1x128xi32>
    tpu.vector_store %arg3[%c0_50, %c12_51, %c0_52], %110 {strides = array<i32>} : memref<1x16x128xi32, #tpu.memory_space<vmem>>, vector<1x1x128xi32>,
    %111 = vector.broadcast %17 : i32 to vector<4x128xi32>
    %112 = arith.cmpi sge, %3, %111 : vector<4x128xi32>
    %113 = arith.extui %112 : vector<4x128xi1> to vector<4x128xi32>
    %cst_53 = arith.constant dense<0> : vector<128xi32>
    %114 = vector.multi_reduction <add>, %113, %cst_53 [0] : vector<4x128xi32> to vector<128xi32>
    %c0_54 = arith.constant 0 : index
    %c13_55 = arith.constant 13 : index
    %c0_56 = arith.constant 0 : index
    %115 = vector.load %arg3[%c0_54, %c13_55, %c0_56] : memref<1x16x128xi32, #tpu.memory_space<vmem>>, vector<1x1x128xi32>
    %116 = vector.shape_cast %115 : vector<1x1x128xi32> to vector<128xi32>
    %117 = vector.shape_cast %114 : vector<128xi32> to vector<1x1x128xi32>
    tpu.vector_store %arg3[%c0_54, %c13_55, %c0_56], %117 {strides = array<i32>} : memref<1x16x128xi32, #tpu.memory_space<vmem>>, vector<1x1x128xi32>,
    %118 = vector.broadcast %18 : i32 to vector<4x128xi32>
    %119 = arith.cmpi sge, %3, %118 : vector<4x128xi32>
    %120 = arith.extui %119 : vector<4x128xi1> to vector<4x128xi32>
    %cst_57 = arith.constant dense<0> : vector<128xi32>
    %121 = vector.multi_reduction <add>, %120, %cst_57 [0] : vector<4x128xi32> to vector<128xi32>
    %c0_58 = arith.constant 0 : index
    %c14_59 = arith.constant 14 : index
    %c0_60 = arith.constant 0 : index
    %122 = vector.load %arg3[%c0_58, %c14_59, %c0_60] : memref<1x16x128xi32, #tpu.memory_space<vmem>>, vector<1x1x128xi32>
    %123 = vector.shape_cast %122 : vector<1x1x128xi32> to vector<128xi32>
    %124 = vector.shape_cast %121 : vector<128xi32> to vector<1x1x128xi32>
    tpu.vector_store %arg3[%c0_58, %c14_59, %c0_60], %124 {strides = array<i32>} : memref<1x16x128xi32, #tpu.memory_space<vmem>>, vector<1x1x128xi32>,
    %125 = vector.broadcast %19 : i32 to vector<4x128xi32>
    %126 = arith.cmpi sge, %3, %125 : vector<4x128xi32>
    %127 = arith.extui %126 : vector<4x128xi1> to vector<4x128xi32>
    %cst_61 = arith.constant dense<0> : vector<128xi32>
    %128 = vector.multi_reduction <add>, %127, %cst_61 [0] : vector<4x128xi32> to vector<128xi32>
    %c0_62 = arith.constant 0 : index
    %c15_63 = arith.constant 15 : index
    %c0_64 = arith.constant 0 : index
    %129 = vector.load %arg3[%c0_62, %c15_63, %c0_64] : memref<1x16x128xi32, #tpu.memory_space<vmem>>, vector<1x1x128xi32>
    %130 = vector.shape_cast %129 : vector<1x1x128xi32> to vector<128xi32>
    %131 = vector.shape_cast %128 : vector<128xi32> to vector<1x1x128xi32>
    tpu.vector_store %arg3[%c0_62, %c15_63, %c0_64], %131 {strides = array<i32>} : memref<1x16x128xi32, #tpu.memory_space<vmem>>, vector<1x1x128xi32>,
    return
  }
  func.func @transform_0(%arg0: i32, %arg1: memref<16xi32, #tpu.memory_space<smem>>) -> (i32, i32) {
    %c0_i32 = arith.constant 0 : i32
    %c0_i32_0 = arith.constant 0 : i32
    return %arg0, %c0_i32 : i32, i32
  }
  func.func @transform_1(%arg0: i32, %arg1: memref<16xi32, #tpu.memory_space<smem>>) -> (i32, i32, i32) {
    %c0_i32 = arith.constant 0 : i32
    %c0_i32_0 = arith.constant 0 : i32
    %c0_i32_1 = arith.constant 0 : i32
    return %arg0, %c0_i32, %c0_i32_0 : i32, i32, i32
  }
}

module attributes {stable_mosaic.version = 11 : i64} {
  func.func @_select_sum_kernel(%arg0: i32, %arg1: memref<1xi32, #tpu.memory_space<smem>>, %arg2: memref<4x128xf32, #tpu.memory_space<vmem>>, %arg3: memref<1x8x128xf32, #tpu.memory_space<vmem>>, %arg4: memref<1x8x128xi32, #tpu.memory_space<vmem>>) attributes {dimension_semantics = [#tpu.dimension_semantics<parallel>], iteration_bounds = array<i64: 1>, scalar_prefetch = 1 : i64, scratch_operands = 0 : i64, tpu.core_type = #tpu.core_type<tc>, window_params = [{transform_indices = @transform_0, window_bounds = array<i64: 4, 128>}, {transform_indices = @transform_1, window_bounds = array<i64: 1, 8, 128>}, {transform_indices = @transform_2, window_bounds = array<i64: 1, 8, 128>}]} {
    %c0 = arith.constant 0 : index
    %c0_0 = arith.constant 0 : index
    %0 = vector.load %arg2[%c0, %c0_0] : memref<4x128xf32, #tpu.memory_space<vmem>>, vector<4x128xf32>
    %1 = tpu.bitcast %0 : vector<4x128xf32> -> vector<4x128xi32>
    %c0_i32 = arith.constant 0 : i32
    %2 = vector.broadcast %c0_i32 : i32 to vector<4x128xi32>
    %3 = arith.maxsi %1, %2 : vector<4x128xi32>
    %c0_1 = arith.constant 0 : index
    %4 = memref.load %arg1[%c0_1] : memref<1xi32, #tpu.memory_space<smem>>
    %5 = vector.broadcast %4 : i32 to vector<4x128xi32>
    %6 = arith.cmpi sgt, %3, %5 : vector<4x128xi32>
    %cst = arith.constant 0.000000e+00 : f32
    %7 = vector.broadcast %cst : f32 to vector<4x128xf32>
    %8 = arith.select %6, %0, %7 : vector<4x128xi1>, vector<4x128xf32>
    %cst_2 = arith.constant dense<0.000000e+00> : vector<128xf32>
    %9 = vector.multi_reduction <add>, %8, %cst_2 [0] : vector<4x128xf32> to vector<128xf32>
    %10 = arith.extui %6 : vector<4x128xi1> to vector<4x128xi32>
    %cst_3 = arith.constant dense<0> : vector<128xi32>
    %11 = vector.multi_reduction <add>, %10, %cst_3 [0] : vector<4x128xi32> to vector<128xi32>
    %12 = tpu.iota {dimensions = array<i32: 0>} : vector<8x128xi32>
    %c0_i32_4 = arith.constant 0 : i32
    %13 = vector.broadcast %c0_i32_4 : i32 to vector<8x128xi32>
    %14 = arith.cmpi eq, %12, %13 : vector<8x128xi32>
    %15 = vector.shape_cast %9 : vector<128xf32> to vector<1x128xf32>
    %cst_5 = arith.constant 0.000000e+00 : f32
    %16 = vector.shape_cast %15 : vector<1x128xf32> to vector<1x128xf32>
    %17 = vector.broadcast %16 : vector<1x128xf32> to vector<8x128xf32>
    %18 = vector.broadcast %cst_5 : f32 to vector<8x128xf32>
    %19 = arith.select %14, %17, %18 : vector<8x128xi1>, vector<8x128xf32>
    %c0_6 = arith.constant 0 : index
    %c0_7 = arith.constant 0 : index
    %c0_8 = arith.constant 0 : index
    %20 = vector.load %arg3[%c0_6, %c0_7, %c0_8] : memref<1x8x128xf32, #tpu.memory_space<vmem>>, vector<1x8x128xf32>
    %21 = vector.shape_cast %20 : vector<1x8x128xf32> to vector<8x128xf32>
    %22 = vector.shape_cast %19 : vector<8x128xf32> to vector<1x8x128xf32>
    tpu.vector_store %arg3[%c0_6, %c0_7, %c0_8], %22 {strides = array<i32>} : memref<1x8x128xf32, #tpu.memory_space<vmem>>, vector<1x8x128xf32>,
    %c0_i32_9 = arith.constant 0 : i32
    %23 = vector.broadcast %c0_i32_9 : i32 to vector<8x128xi32>
    %24 = arith.cmpi eq, %12, %23 : vector<8x128xi32>
    %25 = vector.shape_cast %11 : vector<128xi32> to vector<1x128xi32>
    %c0_i32_10 = arith.constant 0 : i32
    %26 = vector.shape_cast %25 : vector<1x128xi32> to vector<1x128xi32>
    %27 = vector.broadcast %26 : vector<1x128xi32> to vector<8x128xi32>
    %28 = vector.broadcast %c0_i32_10 : i32 to vector<8x128xi32>
    %29 = arith.select %24, %27, %28 : vector<8x128xi1>, vector<8x128xi32>
    %c0_11 = arith.constant 0 : index
    %c0_12 = arith.constant 0 : index
    %c0_13 = arith.constant 0 : index
    %30 = vector.load %arg4[%c0_11, %c0_12, %c0_13] : memref<1x8x128xi32, #tpu.memory_space<vmem>>, vector<1x8x128xi32>
    %31 = vector.shape_cast %30 : vector<1x8x128xi32> to vector<8x128xi32>
    %32 = vector.shape_cast %29 : vector<8x128xi32> to vector<1x8x128xi32>
    tpu.vector_store %arg4[%c0_11, %c0_12, %c0_13], %32 {strides = array<i32>} : memref<1x8x128xi32, #tpu.memory_space<vmem>>, vector<1x8x128xi32>,
    return
  }
  func.func @transform_0(%arg0: i32, %arg1: memref<1xi32, #tpu.memory_space<smem>>) -> (i32, i32) {
    %c0_i32 = arith.constant 0 : i32
    %c0_i32_0 = arith.constant 0 : i32
    return %arg0, %c0_i32 : i32, i32
  }
  func.func @transform_1(%arg0: i32, %arg1: memref<1xi32, #tpu.memory_space<smem>>) -> (i32, i32, i32) {
    %c0_i32 = arith.constant 0 : i32
    %c0_i32_0 = arith.constant 0 : i32
    %c0_i32_1 = arith.constant 0 : i32
    return %arg0, %c0_i32, %c0_i32_0 : i32, i32, i32
  }
  func.func @transform_2(%arg0: i32, %arg1: memref<1xi32, #tpu.memory_space<smem>>) -> (i32, i32, i32) {
    %c0_i32 = arith.constant 0 : i32
    %c0_i32_0 = arith.constant 0 : i32
    %c0_i32_1 = arith.constant 0 : i32
    return %arg0, %c0_i32, %c0_i32_0 : i32, i32, i32
  }
}

</mosaic_0001>

<llo_original>
// kernel: topk_loss.9
$region0: #{topk_loss.9}
  #allocation0 [shape = 'u32[]', space=smem, size = 0x4, offset = 0x4, fixed_abs, tag = 'smem constant byte address 0x4 - core index']
  #allocation1 [shape = 'u32[144,128]{1,0:T(1,128)}', space=vmem, size = 0x12000, scoped, tag = 'internal scratch']
  %s0 = inlined_call_operand.vmem [shape: f32[4,128], index: 0, kind: input, shape index: {}]
  %s1 = inlined_call_operand.vmem [shape: f32[4,128], index: 1, kind: input, shape index: {}]
  %s2 = inlined_call_operand.vmem [shape: f32[4,128], index: 2, kind: output, shape index: {0}]
  %s3 = inlined_call_operand.vmem [shape: s32[1,16,128], index: 3, kind: output, shape index: {1}]
  %4 = xla_tuple %s2, %s3
  %s5 = sld [smem:[#allocation0]]
  $region26: #{topk_loss.9} parent=0
    _
  %s7 = ssub.s32 1, %s5
  %s8 = scalar_select 0, %s7, %s5
  // Predicated region
  $region2: #{topk_loss.9} parent=0 // pred_check
    _
  $region3: #{topk_loss.9} parent=0 // pred_check_branch
    %10 = sbr.rel (0) target = $region5
  $region4: #{topk_loss.9} parent=0 // pred_region
    _
  $region5: #{topk_loss.9} parent=0 // pred_fallthru
    _
  // Predicated region
  $region6: #{topk_loss.9} parent=0 // pred_check
    _
  $region7: #{topk_loss.9} parent=0 // pred_check_branch
    %12 = sbr.rel (0) target = $region9
  $region8: #{topk_loss.9} parent=0 // pred_region
    _
  $region9: #{topk_loss.9} parent=0 // pred_fallthru
    _
  %v13 = vld [vmem:[%s0] sm:$0xf]
  %v14 = vld [vmem:[%s1] sm:$0xf]
  %v15 = vlog2.pop %v13
  %v16 = vmul.f32 %v15, 0.6931472
  %v17 = vsub.f32 0.0, %v16
  %v18 = vmin.f32 %v17, 100.0
  %v19 = vsub.f32 1.0, %v13
  %v20 = vlog2.pop %v19
  %v21 = vmul.f32 %v20, 0.6931472
  %v22 = vsub.f32 0.0, %v21
  %v23 = vmin.f32 %v22, 100.0
  %v24 = vmul.f32 %v14, %v18
  %v25 = vsub.f32 1.0, %v14
  %v26 = vmul.f32 %v25, %v23
  %v27 = vadd.f32 %v24, %v26
  %s28 = smul.u32 0, 4
  %v29 = vlaneseq
  %v30 = vshrl.u32 %v29, 7
  %v31 = vstv %s28
  %v32 = vadd.s32 %v31, %v30
  %vm33 = vcmp.lt.s32.totalorder %v32, 4
  %v34 = vsel %vm33, %v27, 0.0
  %35 = vst [vmem:[%s2] sm:$0xf] %v34
  %vm37 = vcmp.gt.s32.totalorder %v34, 0
  %v38 = vsel %vm37, %v34, 0
  %vm39 = vcmp.ge.s32.totalorder %v38, 0
  %v40 = vsel %vm39, 1, 0
  %vm41 = vcmask 1043456
  %v42 = vsel %vm41, %v40, 0
  %v43 = vrot.slane %v42, 4
  %v44 = vadd.s32 %v42, %v43
  %v45 = vrot.slane %v44, 2
  %v46 = vadd.s32 %v44, %v45
  %v47 = vrot.slane %v46, 1
  %v48 = vadd.s32 %v46, %v47
  %49 = vst [vmem:[%s3] sm:$0x1] %v48
  %vm50 = vcmp.ge.s32.totalorder %v38, 134217728
  %v51 = vsel %vm50, 1, 0
  %v52 = vsel %vm41, %v51, 0
  %v53 = vrot.slane %v52, 4
  %v54 = vadd.s32 %v52, %v53
  %v55 = vrot.slane %v54, 2
  %v56 = vadd.s32 %v54, %v55
  %v57 = vrot.slane %v56, 1
  %v58 = vadd.s32 %v56, %v57
  %59 = vst [vmem:[%s3 + $0x1] sm:$0x1] %v58
  %vm60 = vcmp.ge.s32.totalorder %v38, 268435456
  %v61 = vsel %vm60, 1, 0
  %v62 = vsel %vm41, %v61, 0
  %v63 = vrot.slane %v62, 4
  %v64 = vadd.s32 %v62, %v63
  %v65 = vrot.slane %v64, 2
  %v66 = vadd.s32 %v64, %v65
  %v67 = vrot.slane %v66, 1
  %v68 = vadd.s32 %v66, %v67
  %69 = vst [vmem:[%s3 + $0x2] sm:$0x1] %v68
  %vm70 = vcmp.ge.s32.totalorder %v38, 402653184
  %v71 = vsel %vm70, 1, 0
  %v72 = vsel %vm41, %v71, 0
  %v73 = vrot.slane %v72, 4
  %v74 = vadd.s32 %v72, %v73
  %v75 = vrot.slane %v74, 2
  %v76 = vadd.s32 %v74, %v75
  %v77 = vrot.slane %v76, 1
  %v78 = vadd.s32 %v76, %v77
  %79 = vst [vmem:[%s3 + $0x3] sm:$0x1] %v78
  %vm80 = vcmp.ge.s32.totalorder %v38, 536870912
  %v81 = vsel %vm80, 1, 0
  %v82 = vsel %vm41, %v81, 0
  %v83 = vrot.slane %v82, 4
  %v84 = vadd.s32 %v82, %v83
  %v85 = vrot.slane %v84, 2
  %v86 = vadd.s32 %v84, %v85
  %v87 = vrot.slane %v86, 1
  %v88 = vadd.s32 %v86, %v87
  %89 = vst [vmem:[%s3 + $0x4] sm:$0x1] %v88
  %vm90 = vcmp.ge.s32.totalorder %v38, 671088640
  %v91 = vsel %vm90, 1, 0
  %v92 = vsel %vm41, %v91, 0
  %v93 = vrot.slane %v92, 4
  %v94 = vadd.s32 %v92, %v93
  %v95 = vrot.slane %v94, 2
  %v96 = vadd.s32 %v94, %v95
  %v97 = vrot.slane %v96, 1
  %v98 = vadd.s32 %v96, %v97
  %99 = vst [vmem:[%s3 + $0x5] sm:$0x1] %v98
  %vm100 = vcmp.ge.s32.totalorder %v38, 805306368
  %v101 = vsel %vm100, 1, 0
  %v102 = vsel %vm41, %v101, 0
  %v103 = vrot.slane %v102, 4
  %v104 = vadd.s32 %v102, %v103
  %v105 = vrot.slane %v104, 2
  %v106 = vadd.s32 %v104, %v105
  %v107 = vrot.slane %v106, 1
  %v108 = vadd.s32 %v106, %v107
  %109 = vst [vmem:[%s3 + $0x6] sm:$0x1] %v108
  %vm110 = vcmp.ge.s32.totalorder %v38, 939524096
  %v111 = vsel %vm110, 1, 0
  %v112 = vsel %vm41, %v111, 0
  %v113 = vrot.slane %v112, 4
  %v114 = vadd.s32 %v112, %v113
  %v115 = vrot.slane %v114, 2
  %v116 = vadd.s32 %v114, %v115
  %v117 = vrot.slane %v116, 1
  %v118 = vadd.s32 %v116, %v117
  %119 = vst [vmem:[%s3 + $0x7] sm:$0x1] %v118
  %vm120 = vcmp.ge.s32.totalorder %v38, 1073741824
  %v121 = vsel %vm120, 1, 0
  %v122 = vsel %vm41, %v121, 0
  %v123 = vrot.slane %v122, 4
  %v124 = vadd.s32 %v122, %v123
  %v125 = vrot.slane %v124, 2
  %v126 = vadd.s32 %v124, %v125
  %v127 = vrot.slane %v126, 1
  %v128 = vadd.s32 %v126, %v127
  %129 = vst [vmem:[%s3 + $0x8] sm:$0x1] %v128
  %vm130 = vcmp.ge.s32.totalorder %v38, 1207959552
  %v131 = vsel %vm130, 1, 0
  %v132 = vsel %vm41, %v131, 0
  %v133 = vrot.slane %v132, 4
  %v134 = vadd.s32 %v132, %v133
  %v135 = vrot.slane %v134, 2
  %v136 = vadd.s32 %v134, %v135
  %v137 = vrot.slane %v136, 1
  %v138 = vadd.s32 %v136, %v137
  %139 = vst [vmem:[%s3 + $0x9] sm:$0x1] %v138
  %vm140 = vcmp.ge.s32.totalorder %v38, 1342177280
  %v141 = vsel %vm140, 1, 0
  %v142 = vsel %vm41, %v141, 0
  %v143 = vrot.slane %v142, 4
  %v144 = vadd.s32 %v142, %v143
  %v145 = vrot.slane %v144, 2
  %v146 = vadd.s32 %v144, %v145
  %v147 = vrot.slane %v146, 1
  %v148 = vadd.s32 %v146, %v147
  %149 = vst [vmem:[%s3 + $0xa] sm:$0x1] %v148
  %vm150 = vcmp.ge.s32.totalorder %v38, 1476395008
  %v151 = vsel %vm150, 1, 0
  %v152 = vsel %vm41, %v151, 0
  %v153 = vrot.slane %v152, 4
  %v154 = vadd.s32 %v152, %v153
  %v155 = vrot.slane %v154, 2
  %v156 = vadd.s32 %v154, %v155
  %v157 = vrot.slane %v156, 1
  %v158 = vadd.s32 %v156, %v157
  %159 = vst [vmem:[%s3 + $0xb] sm:$0x1] %v158
  %vm160 = vcmp.ge.s32.totalorder %v38, 1610612736
  %v161 = vsel %vm160, 1, 0
  %v162 = vsel %vm41, %v161, 0
  %v163 = vrot.slane %v162, 4
  %v164 = vadd.s32 %v162, %v163
  %v165 = vrot.slane %v164, 2
  %v166 = vadd.s32 %v164, %v165
  %v167 = vrot.slane %v166, 1
  %v168 = vadd.s32 %v166, %v167
  %169 = vst [vmem:[%s3 + $0xc] sm:$0x1] %v168
  %vm170 = vcmp.ge.s32.totalorder %v38, 1744830464
  %v171 = vsel %vm170, 1, 0
  %v172 = vsel %vm41, %v171, 0
  %v173 = vrot.slane %v172, 4
  %v174 = vadd.s32 %v172, %v173
  %v175 = vrot.slane %v174, 2
  %v176 = vadd.s32 %v174, %v175
  %v177 = vrot.slane %v176, 1
  %v178 = vadd.s32 %v176, %v177
  %179 = vst [vmem:[%s3 + $0xd] sm:$0x1] %v178
  %vm180 = vcmp.ge.s32.totalorder %v38, 1879048192
  %v181 = vsel %vm180, 1, 0
  %v182 = vsel %vm41, %v181, 0
  %v183 = vrot.slane %v182, 4
  %v184 = vadd.s32 %v182, %v183
  %v185 = vrot.slane %v184, 2
  %v186 = vadd.s32 %v184, %v185
  %v187 = vrot.slane %v186, 1
  %v188 = vadd.s32 %v186, %v187
  %189 = vst [vmem:[%s3 + $0xe] sm:$0x1] %v188
  %vm190 = vcmp.ge.s32.totalorder %v38, 2013265920
  %v191 = vsel %vm190, 1, 0
  %v192 = vsel %vm41, %v191, 0
  %v193 = vrot.slane %v192, 4
  %v194 = vadd.s32 %v192, %v193
  %v195 = vrot.slane %v194, 2
  %v196 = vadd.s32 %v194, %v195
  %v197 = vrot.slane %v196, 1
  %v198 = vadd.s32 %v196, %v197
  %199 = vst [vmem:[%s3 + $0xf] sm:$0x1] %v198
  // Predicated region
  $region10: #{topk_loss.9} parent=0 // pred_check
    _
  $region11: #{topk_loss.9} parent=0 // pred_check_branch
    %201 = sbr.rel (0) target = $region13
  $region12: #{topk_loss.9} parent=0 // pred_region
    _
  $region13: #{topk_loss.9} parent=0 // pred_fallthru
    _
  // Predicated region
  $region14: #{topk_loss.9} parent=0 // pred_check
    _
  $region15: #{topk_loss.9} parent=0 // pred_check_branch
    %203 = sbr.rel (0) target = $region17
  $region16: #{topk_loss.9} parent=0 // pred_region
    _
  $region17: #{topk_loss.9} parent=0 // pred_fallthru
    _
  // Predicated region
  $region18: #{topk_loss.9} parent=0 // pred_check
    _
  $region19: #{topk_loss.9} parent=0 // pred_check_branch
    %205 = sbr.rel (0) target = $region21
  $region20: #{topk_loss.9} parent=0 // pred_region
    _
  $region21: #{topk_loss.9} parent=0 // pred_fallthru
    _
  // Predicated region
  $region22: #{topk_loss.9} parent=0 // pred_check
    _
  $region23: #{topk_loss.9} parent=0 // pred_check_branch
    %207 = sbr.rel (0) target = $region25
  $region24: #{topk_loss.9} parent=0 // pred_region
    _
  $region25: #{topk_loss.9} parent=0 // pred_fallthru
    _

// kernel: topk_loss.17
$region0: #{topk_loss.17}
  #allocation0 [shape = 'u32[]', space=smem, size = 0x4, offset = 0x4, fixed_abs, tag = 'smem constant byte address 0x4 - core index']
  #allocation1 [shape = 'u32[144,128]{1,0:T(1,128)}', space=vmem, size = 0x12000, scoped, tag = 'internal scratch']
  #allocation2 [shape = 's32[1]{0}', space=sflag, size = 0x4, scoped, tag = 'scoped memory for topk_loss.17']
  #allocation3 [shape = 's32[1]{0:T(128)S(6)}', space=smem, size = 0x200, scoped, tag = 'prefetched SMEM operand 0']
  %s0 = inlined_call_operand.<no memory space> [shape: s32[1], index: 0, kind: input, shape index: {}]
  %s1 = inlined_call_operand.vmem [shape: f32[4,128], index: 1, kind: input, shape index: {}]
  %s2 = inlined_call_operand.vmem [shape: f32[1,8,128], index: 2, kind: output, shape index: {0}]
  %s3 = inlined_call_operand.vmem [shape: s32[1,8,128], index: 3, kind: output, shape index: {1}]
  %4 = xla_tuple %s2, %s3
  %s5 = sld [smem:[#allocation0]]
  $region22: #{topk_loss.17} parent=0
    _
  %s7 = ssub.s32 1, %s5
  %s8 = scalar_select 0, %s7, %s5
  %9 = sst [smem:[#allocation3]] %s0
  // Predicated region
  $region2: #{topk_loss.17} parent=0 // pred_check
    _
  $region3: #{topk_loss.17} parent=0 // pred_check_branch
    %11 = sbr.rel (0) target = $region5
  $region4: #{topk_loss.17} parent=0 // pred_region
    _
  $region5: #{topk_loss.17} parent=0 // pred_fallthru
    _
  %v12 = vld [vmem:[%s1] sm:$0xf]
  %vm14 = vcmp.gt.s32.totalorder %v12, 0
  %v15 = vsel %vm14, %v12, 0
  %s16 = sld [smem:[#allocation3]]
  %v17 = vstv %s16
  %vm18 = vcmp.gt.s32.totalorder %v15, %v17
  %v19 = vsel %vm18, %v12, 0.0
  %vm20 = vcmask 1043456
  %v21 = vsel %vm20, %v19, 0.0
  %v22 = vrot.slane %v21, 4
  %v23 = vadd.f32 %v21, %v22
  %v24 = vrot.slane %v23, 2
  %v25 = vadd.f32 %v23, %v24
  %v26 = vrot.slane %v25, 1
  %v27 = vadd.f32 %v25, %v26
  %v28 = vsel %vm18, 1, 0
  %v29 = vsel %vm20, %v28, 0
  %v30 = vrot.slane %v29, 4
  %v31 = vadd.s32 %v29, %v30
  %v32 = vrot.slane %v31, 2
  %v33 = vadd.s32 %v31, %v32
  %v34 = vrot.slane %v33, 1
  %v35 = vadd.s32 %v33, %v34
  %v36 = vlaneseq
  %v37 = vshrl.u32 %v36, 7
  %vm38 = vcmp.eq.s32.totalorder %v37, 0
  %v39 = vsel %vm38, %v27, 0.0
  %40 = vst [vmem:[%s2] sm:$0xff] %v39
  %v41 = vsel %vm38, %v35, 0
  %42 = vst [vmem:[%s3] sm:$0xff] %v41
  // Predicated region
  $region6: #{topk_loss.17} parent=0 // pred_check
    _
  $region7: #{topk_loss.17} parent=0 // pred_check_branch
    %44 = sbr.rel (0) target = $region9
  $region8: #{topk_loss.17} parent=0 // pred_region
    _
  $region9: #{topk_loss.17} parent=0 // pred_fallthru
    _
  // Predicated region
  $region10: #{topk_loss.17} parent=0 // pred_check
    _
  $region11: #{topk_loss.17} parent=0 // pred_check_branch
    %46 = sbr.rel (0) target = $region13
  $region12: #{topk_loss.17} parent=0 // pred_region
    _
  $region13: #{topk_loss.17} parent=0 // pred_fallthru
    _
  // Predicated region
  $region14: #{topk_loss.17} parent=0 // pred_check
    _
  $region15: #{topk_loss.17} parent=0 // pred_check_branch
    %48 = sbr.rel (0) target = $region17
  $region16: #{topk_loss.17} parent=0 // pred_region
    _
  $region17: #{topk_loss.17} parent=0 // pred_fallthru
    _
  // Predicated region
  $region18: #{topk_loss.17} parent=0 // pred_check
    _
  $region19: #{topk_loss.17} parent=0 // pred_check_branch
    %50 = sbr.rel (0) target = $region21
  $region20: #{topk_loss.17} parent=0 // pred_region
    _
  $region21: #{topk_loss.17} parent=0 // pred_fallthru
    _

// kernel: topk_loss.10
$region0: #{topk_loss.10}
  #allocation0 [shape = 'u32[]', space=smem, size = 0x4, offset = 0x4, fixed_abs, tag = 'smem constant byte address 0x4 - core index']
  #allocation1 [shape = 'u32[144,128]{1,0:T(1,128)}', space=vmem, size = 0x12000, scoped, tag = 'internal scratch']
  #allocation2 [shape = 's32[1]{0}', space=sflag, size = 0x4, scoped, tag = 'scoped memory for topk_loss.10']
  #allocation3 [shape = 'u8[512]{0}', space=smem, size = 0x200, scoped, tag = 'prefetched SMEM operand 0']
  %s0 = inlined_call_operand.vmem [shape: s32[16], index: 0, kind: input, shape index: {}]
  %s1 = inlined_call_operand.vmem [shape: f32[4,128], index: 1, kind: input, shape index: {}]
  %s2 = inlined_call_operand.vmem [shape: s32[1,16,128], index: 2, kind: output, shape index: {}]
  %s3 = sld [smem:[#allocation0]]
  $region14: #{topk_loss.10} parent=0
    _
  %s5 = ssub.s32 1, %s3
  %s6 = scalar_select 0, %s5, %s3
  %s7 = sshll.u32 %s0, 4
  %s8 = int_to_ptr.vmem [resolvable:$true] %s7
  %10 = dma.vmem_to_smem %s8, 16, [#allocation3], [#allocation2]
  %11 = dma.done [#allocation2], 16
  %12 = sfence
  // Predicated region
  $region2: #{topk_loss.10} parent=0 // pred_check
    _
  $region3: #{topk_loss.10} parent=0 // pred_check_branch
    %14 = sbr.rel (0) target = $region5
  $region4: #{topk_loss.10} parent=0 // pred_region
    _
  $region5: #{topk_loss.10} parent=0 // pred_fallthru
    _
  %v15 = vld [vmem:[%s1] sm:$0xf]
  %vm17 = vcmp.gt.s32.totalorder %v15, 0
  %v18 = vsel %vm17, %v15, 0
  %s19 = sld [smem:[#allocation3]]
  %s20 = sld [smem:[#allocation3 + $0x1]]
  %s21 = sld [smem:[#allocation3 + $0x2]]
  %s22 = sld [smem:[#allocation3 + $0x3]]
  %s23 = sld [smem:[#allocation3 + $0x4]]
  %s24 = sld [smem:[#allocation3 + $0x5]]
  %s25 = sld [smem:[#allocation3 + $0x6]]
  %s26 = sld [smem:[#allocation3 + $0x7]]
  %s27 = sld [smem:[#allocation3 + $0x8]]
  %s28 = sld [smem:[#allocation3 + $0x9]]
  %s29 = sld [smem:[#allocation3 + $0xa]]
  %s30 = sld [smem:[#allocation3 + $0xb]]
  %s31 = sld [smem:[#allocation3 + $0xc]]
  %s32 = sld [smem:[#allocation3 + $0xd]]
  %s33 = sld [smem:[#allocation3 + $0xe]]
  %s34 = sld [smem:[#allocation3 + $0xf]]
  %v35 = vstv %s19
  %vm36 = vcmp.ge.s32.totalorder %v18, %v35
  %v37 = vsel %vm36, 1, 0
  %vm38 = vcmask 1043456
  %v39 = vsel %vm38, %v37, 0
  %v40 = vrot.slane %v39, 4
  %v41 = vadd.s32 %v39, %v40
  %v42 = vrot.slane %v41, 2
  %v43 = vadd.s32 %v41, %v42
  %v44 = vrot.slane %v43, 1
  %v45 = vadd.s32 %v43, %v44
  %46 = vst [vmem:[%s2] sm:$0x1] %v45
  %v47 = vstv %s20
  %vm48 = vcmp.ge.s32.totalorder %v18, %v47
  %v49 = vsel %vm48, 1, 0
  %v50 = vsel %vm38, %v49, 0
  %v51 = vrot.slane %v50, 4
  %v52 = vadd.s32 %v50, %v51
  %v53 = vrot.slane %v52, 2
  %v54 = vadd.s32 %v52, %v53
  %v55 = vrot.slane %v54, 1
  %v56 = vadd.s32 %v54, %v55
  %57 = vst [vmem:[%s2 + $0x1] sm:$0x1] %v56
  %v58 = vstv %s21
  %vm59 = vcmp.ge.s32.totalorder %v18, %v58
  %v60 = vsel %vm59, 1, 0
  %v61 = vsel %vm38, %v60, 0
  %v62 = vrot.slane %v61, 4
  %v63 = vadd.s32 %v61, %v62
  %v64 = vrot.slane %v63, 2
  %v65 = vadd.s32 %v63, %v64
  %v66 = vrot.slane %v65, 1
  %v67 = vadd.s32 %v65, %v66
  %68 = vst [vmem:[%s2 + $0x2] sm:$0x1] %v67
  %v69 = vstv %s22
  %vm70 = vcmp.ge.s32.totalorder %v18, %v69
  %v71 = vsel %vm70, 1, 0
  %v72 = vsel %vm38, %v71, 0
  %v73 = vrot.slane %v72, 4
  %v74 = vadd.s32 %v72, %v73
  %v75 = vrot.slane %v74, 2
  %v76 = vadd.s32 %v74, %v75
  %v77 = vrot.slane %v76, 1
  %v78 = vadd.s32 %v76, %v77
  %79 = vst [vmem:[%s2 + $0x3] sm:$0x1] %v78
  %v80 = vstv %s23
  %vm81 = vcmp.ge.s32.totalorder %v18, %v80
  %v82 = vsel %vm81, 1, 0
  %v83 = vsel %vm38, %v82, 0
  %v84 = vrot.slane %v83, 4
  %v85 = vadd.s32 %v83, %v84
  %v86 = vrot.slane %v85, 2
  %v87 = vadd.s32 %v85, %v86
  %v88 = vrot.slane %v87, 1
  %v89 = vadd.s32 %v87, %v88
  %90 = vst [vmem:[%s2 + $0x4] sm:$0x1] %v89
  %v91 = vstv %s24
  %vm92 = vcmp.ge.s32.totalorder %v18, %v91
  %v93 = vsel %vm92, 1, 0
  %v94 = vsel %vm38, %v93, 0
  %v95 = vrot.slane %v94, 4
  %v96 = vadd.s32 %v94, %v95
  %v97 = vrot.slane %v96, 2
  %v98 = vadd.s32 %v96, %v97
  %v99 = vrot.slane %v98, 1
  %v100 = vadd.s32 %v98, %v99
  %101 = vst [vmem:[%s2 + $0x5] sm:$0x1] %v100
  %v102 = vstv %s25
  %vm103 = vcmp.ge.s32.totalorder %v18, %v102
  %v104 = vsel %vm103, 1, 0
  %v105 = vsel %vm38, %v104, 0
  %v106 = vrot.slane %v105, 4
  %v107 = vadd.s32 %v105, %v106
  %v108 = vrot.slane %v107, 2
  %v109 = vadd.s32 %v107, %v108
  %v110 = vrot.slane %v109, 1
  %v111 = vadd.s32 %v109, %v110
  %112 = vst [vmem:[%s2 + $0x6] sm:$0x1] %v111
  %v113 = vstv %s26
  %vm114 = vcmp.ge.s32.totalorder %v18, %v113
  %v115 = vsel %vm114, 1, 0
  %v116 = vsel %vm38, %v115, 0
  %v117 = vrot.slane %v116, 4
  %v118 = vadd.s32 %v116, %v117
  %v119 = vrot.slane %v118, 2
  %v120 = vadd.s32 %v118, %v119
  %v121 = vrot.slane %v120, 1
  %v122 = vadd.s32 %v120, %v121
  %123 = vst [vmem:[%s2 + $0x7] sm:$0x1] %v122
  %v124 = vstv %s27
  %vm125 = vcmp.ge.s32.totalorder %v18, %v124
  %v126 = vsel %vm125, 1, 0
  %v127 = vsel %vm38, %v126, 0
  %v128 = vrot.slane %v127, 4
  %v129 = vadd.s32 %v127, %v128
  %v130 = vrot.slane %v129, 2
  %v131 = vadd.s32 %v129, %v130
  %v132 = vrot.slane %v131, 1
  %v133 = vadd.s32 %v131, %v132
  %134 = vst [vmem:[%s2 + $0x8] sm:$0x1] %v133
  %v135 = vstv %s28
  %vm136 = vcmp.ge.s32.totalorder %v18, %v135
  %v137 = vsel %vm136, 1, 0
  %v138 = vsel %vm38, %v137, 0
  %v139 = vrot.slane %v138, 4
  %v140 = vadd.s32 %v138, %v139
  %v141 = vrot.slane %v140, 2
  %v142 = vadd.s32 %v140, %v141
  %v143 = vrot.slane %v142, 1
  %v144 = vadd.s32 %v142, %v143
  %145 = vst [vmem:[%s2 + $0x9] sm:$0x1] %v144
  %v146 = vstv %s29
  %vm147 = vcmp.ge.s32.totalorder %v18, %v146
  %v148 = vsel %vm147, 1, 0
  %v149 = vsel %vm38, %v148, 0
  %v150 = vrot.slane %v149, 4
  %v151 = vadd.s32 %v149, %v150
  %v152 = vrot.slane %v151, 2
  %v153 = vadd.s32 %v151, %v152
  %v154 = vrot.slane %v153, 1
  %v155 = vadd.s32 %v153, %v154
  %156 = vst [vmem:[%s2 + $0xa] sm:$0x1] %v155
  %v157 = vstv %s30
  %vm158 = vcmp.ge.s32.totalorder %v18, %v157
  %v159 = vsel %vm158, 1, 0
  %v160 = vsel %vm38, %v159, 0
  %v161 = vrot.slane %v160, 4
  %v162 = vadd.s32 %v160, %v161
  %v163 = vrot.slane %v162, 2
  %v164 = vadd.s32 %v162, %v163
  %v165 = vrot.slane %v164, 1
  %v166 = vadd.s32 %v164, %v165
  %167 = vst [vmem:[%s2 + $0xb] sm:$0x1] %v166
  %v168 = vstv %s31
  %vm169 = vcmp.ge.s32.totalorder %v18, %v168
  %v170 = vsel %vm169, 1, 0
  %v171 = vsel %vm38, %v170, 0
  %v172 = vrot.slane %v171, 4
  %v173 = vadd.s32 %v171, %v172
  %v174 = vrot.slane %v173, 2
  %v175 = vadd.s32 %v173, %v174
  %v176 = vrot.slane %v175, 1
  %v177 = vadd.s32 %v175, %v176
  %178 = vst [vmem:[%s2 + $0xc] sm:$0x1] %v177
  %v179 = vstv %s32
  %vm180 = vcmp.ge.s32.totalorder %v18, %v179
  %v181 = vsel %vm180, 1, 0
  %v182 = vsel %vm38, %v181, 0
  %v183 = vrot.slane %v182, 4
  %v184 = vadd.s32 %v182, %v183
  %v185 = vrot.slane %v184, 2
  %v186 = vadd.s32 %v184, %v185
  %v187 = vrot.slane %v186, 1
  %v188 = vadd.s32 %v186, %v187
  %189 = vst [vmem:[%s2 + $0xd] sm:$0x1] %v188
  %v190 = vstv %s33
  %vm191 = vcmp.ge.s32.totalorder %v18, %v190
  %v192 = vsel %vm191, 1, 0
  %v193 = vsel %vm38, %v192, 0
  %v194 = vrot.slane %v193, 4
  %v195 = vadd.s32 %v193, %v194
  %v196 = vrot.slane %v195, 2
  %v197 = vadd.s32 %v195, %v196
  %v198 = vrot.slane %v197, 1
  %v199 = vadd.s32 %v197, %v198
  %200 = vst [vmem:[%s2 + $0xe] sm:$0x1] %v199
  %v201 = vstv %s34
  %vm202 = vcmp.ge.s32.totalorder %v18, %v201
  %v203 = vsel %vm202, 1, 0
  %v204 = vsel %vm38, %v203, 0
  %v205 = vrot.slane %v204, 4
  %v206 = vadd.s32 %v204, %v205
  %v207 = vrot.slane %v206, 2
  %v208 = vadd.s32 %v206, %v207
  %v209 = vrot.slane %v208, 1
  %v210 = vadd.s32 %v208, %v209
  %211 = vst [vmem:[%s2 + $0xf] sm:$0x1] %v210
  // Predicated region
  $region6: #{topk_loss.10} parent=0 // pred_check
    _
  $region7: #{topk_loss.10} parent=0 // pred_check_branch
    %213 = sbr.rel (0) target = $region9
  $region8: #{topk_loss.10} parent=0 // pred_region
    _
  $region9: #{topk_loss.10} parent=0 // pred_fallthru
    _
  // Predicated region
  $region10: #{topk_loss.10} parent=0 // pred_check
    _
  $region11: #{topk_loss.10} parent=0 // pred_check_branch
    %215 = sbr.rel (0) target = $region13
  $region12: #{topk_loss.10} parent=0 // pred_region
    _
  $region13: #{topk_loss.10} parent=0 // pred_fallthru
    _

</llo_original>
